<compile_context>
chip_gen: v5e
topology: v5e:2x2
jax: 0.10.0
libtpu: 0.0.40
codegen_flags: <defaults>
</compile_context>

<pallas_src>
import jax
import jax.numpy as jnp
from jax import lax
from jax.experimental import pallas as pl
from jax.experimental.pallas import tpu as pltpu

_LANE = 128


def _round_up(x, m):
    return ((x + m - 1) // m) * m


def _round_down(x, m):
    return (x // m) * m


def _linear_kernel(x_ref, w_ref, b_ref, o_ref):
    # x_ref: (TM, Kc)   w_ref: (TN, Kc)   b_ref: (1, TN)   o_ref: (TM, TN)
    # Contract on the shared last axis: x @ W.T without a transpose pass.
    acc = lax.dot_general(
        x_ref[...], w_ref[...],
        dimension_numbers=(((1,), (1,)), ((), ())),
        preferred_element_type=jnp.float32,
    )
    o_ref[...] = (acc + b_ref[...].astype(jnp.float32)).astype(o_ref.dtype)


def _vmem_limit_and_budget():
    """Per-generation VMEM limit for the call + working-set budget for tiles."""
    try:
        phys = int(pltpu.get_tpu_info().vmem_capacity_bytes)
    except Exception:
        phys = 64 << 20  # conservative fallback (v7x per-TC size)
    # v5e/v6e (128 MiB physical) -> 64 MiB limit; v7x (64 MiB / TC) -> 32 MiB.
    limit = max(32 << 20, min(phys // 2, 64 << 20))
    budget = (limit * 3) // 4          # ~25% headroom for compiler scratch
    return limit, budget


def _lane_fold(embedding_size, rows):
    """Largest k with k*E a multiple of 128 (lane-dense out) and k | rows."""
    if embedding_size >= _LANE or _LANE % embedding_size != 0:
        return 1
    k = _LANE // embedding_size        # power of two since E divides 128
    while k > 1 and rows % k != 0:
        k //= 2
    return k


def _choose_tiles(m_rows, n_cols, k_cols, itemsize, budget, row_align):
    """Pick (tile_m, tile_n) so the double-buffered working set fits `budget`."""
    # Tile the (folded) embedding axis only when it is genuinely wide.
    tn = n_cols if n_cols <= 2048 else 2048            # multiple of 128 when tiled
    wx = _round_up(k_cols, _LANE)                       # padded x lane width
    wo = _round_up(tn, _LANE)                           # padded out lane width
    # Weight tile (double-buffered by the pipeline) + bias tile.
    const = 2 * tn * _round_up(k_cols, _LANE) * itemsize + 2 * wo * itemsize
    # Double-buffered x/out rows + an f32 accumulator row.
    per_row = 2 * (wx + wo) * itemsize + wo * 4
    tm = max(row_align, (budget - const) // per_row)
    tm = max(row_align, _round_down(tm, row_align))
    if m_rows <= tm:
        if m_rows >= 2 * 512:
            # Big enough to matter: keep >= 2 M-tiles so both v7x cores work.
            tm = _round_up(pl.cdiv(m_rows, 2), row_align)
        else:
            tm = m_rows                 # full extent (legal even if not 8-aligned)
    return tm, tn


def concept_embedding_forward(inputs, weight, bias, *, tile_rows=None):
    """inputs: (B, F, T); weight: (E, F); bias: (E,).  Returns (B, T, E)."""
    B, F, T = inputs.shape
    E = weight.shape[0]
    M = B * T

    out_dtype = inputs.dtype
    itemsize = jnp.dtype(out_dtype).itemsize
    row_align = 8 if itemsize >= 4 else (16 if itemsize == 2 else 32)

    # ---- lane-density fold: k consecutive output rows -> one 128-lane row ----
    k = _lane_fold(E, M)
    m_f = M // k                       # folded row count
    kf = k * F                         # folded contraction width
    n = k * E                          # folded output width (k>1 => exactly 128)

    # x fold is a free contiguous row-major regroup of reshape(-1, F).
    x_f = inputs.reshape(m_f, kf)
    if k > 1:
        w_k = jnp.kron(jnp.eye(k, dtype=weight.dtype), weight)   # (k*E, k*F)
        b_k = jnp.tile(bias, k)
    else:
        w_k, b_k = weight, bias
    b2d = b_k.reshape(1, n)

    # ---- tile sizes from the per-generation VMEM budget ----
    vmem_limit, budget = _vmem_limit_and_budget()
    if tile_rows is not None:
        tm = max(row_align, _round_down(int(tile_rows), row_align))
        tm = min(tm, _round_up(m_f, row_align))
        if m_f <= tm:
            tm = m_f
        tn = n if n <= 2048 else 2048
    else:
        tm, tn = _choose_tiles(m_f, n, kf, itemsize, budget, row_align)
    grid_m = pl.cdiv(m_f, tm)
    grid_n = pl.cdiv(n, tn)

    cost = pl.CostEstimate(
        flops=int(2 * m_f * kf * n),
        transcendentals=0,
        bytes_accessed=int(
            grid_n * m_f * kf * itemsize                      # x (re-read per N tile)
            + w_k.size * jnp.dtype(weight.dtype).itemsize     # W (block-diag)
            + n * jnp.dtype(bias.dtype).itemsize              # b
            + m_f * n * itemsize                              # out
        ),
    )

    out_f = pl.pallas_call(
        _linear_kernel,
        out_shape=jax.ShapeDtypeStruct((m_f, n), out_dtype),
        grid_spec=pltpu.PrefetchScalarGridSpec(
            num_scalar_prefetch=0,
            grid=(grid_m, grid_n),
            in_specs=[
                # x: tiled along folded rows, full contraction width.
                pl.BlockSpec((tm, kf), lambda i, j: (i, 0)),
                # W / bias: tiled only along the (folded) embedding axis;
                # grid-invariant across all M tiles.
                pl.BlockSpec((tn, kf), lambda i, j: (j, 0)),
                pl.BlockSpec((1, tn), lambda i, j: (0, j)),
            ],
            out_specs=pl.BlockSpec((tm, tn), lambda i, j: (i, j)),
        ),
        compiler_params=pltpu.CompilerParams(
            # All tiles are independent -> shard across TCs on v7x.
            dimension_semantics=("parallel", "parallel"),
            vmem_limit_bytes=vmem_limit,
        ),
        cost_estimate=cost,
    )(x_f, w_k, b2d)

    # Dropout: nn.Dropout is identity in eval mode (deterministic path).
    # TODO(synk): training-mode dropout (pltpu.prng_seed / prng_random_bits)
    # cannot match PyTorch RNG bit-for-bit; eval semantics are implemented.
    # Un-fold: (m_f, k*E) row-major flat == (M, E) row-major flat == (B, T, E).
    return out_f.reshape(B, T, E)


def _init_params(key, num_features, embedding_size, dtype=jnp.float32):
    # Deterministic init mirroring nn.Linear default: U(-1/sqrt(F), 1/sqrt(F)).
    kw, kb = jax.random.split(key)
    bound = 1.0 / (num_features ** 0.5)
    weight = jax.random.uniform(
        kw, (embedding_size, num_features), dtype, minval=-bound, maxval=bound)
    bias = jax.random.uniform(
        kb, (embedding_size,), dtype, minval=-bound, maxval=bound)
    return weight, bias


if __name__ == "__main__":
    B, F, T, E = 2, 4, 8, 32

    key = jax.random.PRNGKey(0)
    k_in, k_param = jax.random.split(key)

    inputs = jax.random.normal(k_in, (B, F, T), dtype=jnp.float32)
    weight, bias = _init_params(k_param, F, E)

    out = concept_embedding_forward(inputs, weight, bias)
    out = jax.block_until_ready(out)

    # Reference check against plain-JAX computation of the same semantics.
    ref = (inputs.reshape(-1, F) @ weight.T + bias).reshape(B, T, E)
    assert out.shape == (B, T, E)
    assert jnp.allclose(out, ref, atol=1e-5, rtol=1e-5)

    print("KERNEL_OK")
</pallas_src>

<mosaic_0001>
module attributes {stable_mosaic.version = 11 : i64} {
  func.func @_linear_kernel(%arg0: i32, %arg1: i32, %arg2: memref<4x16xf32, #tpu.memory_space<vmem>>, %arg3: memref<128x16xf32, #tpu.memory_space<vmem>>, %arg4: memref<1x128xf32, #tpu.memory_space<vmem>>, %arg5: memref<4x128xf32, #tpu.memory_space<vmem>>) attributes {dimension_semantics = [#tpu.dimension_semantics<parallel>, #tpu.dimension_semantics<parallel>], iteration_bounds = array<i64: 1, 1>, scalar_prefetch = 0 : i64, scratch_operands = 0 : i64, tpu.core_type = #tpu.core_type<tc>, window_params = [{transform_indices = @transform_0, window_bounds = array<i64: 4, 16>}, {transform_indices = @transform_1, window_bounds = array<i64: 128, 16>}, {transform_indices = @transform_2, window_bounds = array<i64: 1, 128>}, {transform_indices = @transform_3, window_bounds = array<i64: 4, 128>}]} {
    %c0 = arith.constant 0 : index
    %c0_0 = arith.constant 0 : index
    %0 = vector.load %arg2[%c0, %c0_0] : memref<4x16xf32, #tpu.memory_space<vmem>>, vector<4x16xf32>
    %c0_1 = arith.constant 0 : index
    %c0_2 = arith.constant 0 : index
    %1 = vector.load %arg3[%c0_1, %c0_2] : memref<128x16xf32, #tpu.memory_space<vmem>>, vector<128x16xf32>
    %cst = arith.constant dense<0.000000e+00> : vector<4x128xf32>
    %2 = tpu.matmul %0, %1, %cst {dimension_numbers = #tpu.dot_dimension_numbers<[1], [1], [0], [0], [0, 0, 1, 0], [], []>} : vector<4x16xf32>, vector<128x16xf32>, vector<4x128xf32> -> vector<4x128xf32>
    %c0_3 = arith.constant 0 : index
    %c0_4 = arith.constant 0 : index
    %3 = vector.load %arg4[%c0_3, %c0_4] : memref<1x128xf32, #tpu.memory_space<vmem>>, vector<1x128xf32>
    %4 = vector.broadcast %3 : vector<1x128xf32> to vector<4x128xf32>
    %5 = arith.addf %2, %4 : vector<4x128xf32>
    %c0_5 = arith.constant 0 : index
    %c0_6 = arith.constant 0 : index
    %6 = vector.load %arg5[%c0_5, %c0_6] : memref<4x128xf32, #tpu.memory_space<vmem>>, vector<4x128xf32>
    tpu.vector_store %arg5[%c0_5, %c0_6], %5 {strides = array<i32>} : memref<4x128xf32, #tpu.memory_space<vmem>>, vector<4x128xf32>,
    return
  }
  func.func @transform_0(%arg0: i32, %arg1: i32) -> (i32, i32) {
    %c0_i32 = arith.constant 0 : i32
    %c0_i32_0 = arith.constant 0 : i32
    return %arg0, %c0_i32 : i32, i32
  }
  func.func @transform_1(%arg0: i32, %arg1: i32) -> (i32, i32) {
    %c0_i32 = arith.constant 0 : i32
    %c0_i32_0 = arith.constant 0 : i32
    return %arg1, %c0_i32 : i32, i32
  }
  func.func @transform_2(%arg0: i32, %arg1: i32) -> (i32, i32) {
    %c0_i32 = arith.constant 0 : i32
    %c0_i32_0 = arith.constant 0 : i32
    return %c0_i32, %arg1 : i32, i32
  }
  func.func @transform_3(%arg0: i32, %arg1: i32) -> (i32, i32) {
    %c0_i32 = arith.constant 0 : i32
    return %arg0, %arg1 : i32, i32
  }
}

</mosaic_0001>

<llo_original>
// kernel: tpu_custom_call.1
$region0: #{tpu_custom_call.1}
  #allocation0 [shape = 'u32[]', space=smem, size = 0x4, offset = 0x4, fixed_abs, tag = 'smem constant byte address 0x4 - core index']
  #allocation1 [shape = 'u32[72,128]{1,0:T(1,128)}', space=vmem, size = 0x9000, scoped, tag = 'internal scratch']
  %s0 = inlined_call_operand.vmem [shape: f32[4,16], index: 0, kind: input, shape index: {}]
  %s1 = inlined_call_operand.vmem [shape: f32[128,16], index: 1, kind: input, shape index: {}]
  %s2 = inlined_call_operand.vmem [shape: f32[1,128], index: 2, kind: input, shape index: {}]
  %s3 = inlined_call_operand.hbm [shape: f32[4,128], index: 3, kind: output, shape index: {}]
  %s4 = sld [smem:[#allocation0]]
  $region22: #{tpu_custom_call.1} parent=0
    _
  %s6 = ssub.s32 1, %s4
  %s7 = scalar_select 0, %s6, %s4
  $region1: #{tpu_custom_call.1} parent=0
    #allocation2 [shape = 'u8[2048]{0}', space=vmem, size = 0x800, scoped, tag = 'output window, operand 0, single buffered']
    #allocation3 [shape = 's32[1]{0}', space=sflag, size = 0x4, scoped, tag = 'scoped memory for tpu_custom_call.1']
    %8 = vsyncpa [#allocation3], 0
    // Predicated region
    $region2: #{tpu_custom_call.1} parent=1 // pred_check
      _
    $region3: #{tpu_custom_call.1} parent=1 // pred_check_branch
      %10 = sbr.rel (0) target = $region5
    $region4: #{tpu_custom_call.1} parent=1 // pred_region
      _
    $region5: #{tpu_custom_call.1} parent=1 // pred_fallthru
      _
    // Predicated region
    $region6: #{tpu_custom_call.1} parent=1 // pred_check
      _
    $region7: #{tpu_custom_call.1} parent=1 // pred_check_branch
      %12 = sbr.rel (0) target = $region9
    $region8: #{tpu_custom_call.1} parent=1 // pred_region
      _
    $region9: #{tpu_custom_call.1} parent=1 // pred_fallthru
      _
    // Predicated region
    $region10: #{tpu_custom_call.1} parent=1 // pred_check
      _
    $region11: #{tpu_custom_call.1} parent=1 // pred_check_branch
      %14 = sbr.rel (0) target = $region13
    $region12: #{tpu_custom_call.1} parent=1 // pred_region
      _
    $region13: #{tpu_custom_call.1} parent=1 // pred_fallthru
      _
    %v15 = vld [vmem:[%s0] sm:$0xf]
    %v16 = vld [vmem:[%s1] sm:$0xff]
    %v17 = vld [vmem:[%s1 + $0x8] sm:$0xff]
    %v18 = vld [vmem:[%s1 + $0x10] sm:$0xff]
    %v19 = vld [vmem:[%s1 + $0x18] sm:$0xff]
    %v20 = vld [vmem:[%s1 + $0x20] sm:$0xff]
    %v21 = vld [vmem:[%s1 + $0x28] sm:$0xff]
    %v22 = vld [vmem:[%s1 + $0x30] sm:$0xff]
    %v23 = vld [vmem:[%s1 + $0x38] sm:$0xff]
    %v24 = vld [vmem:[%s1 + $0x40] sm:$0xff]
    %v25 = vld [vmem:[%s1 + $0x48] sm:$0xff]
    %v26 = vld [vmem:[%s1 + $0x50] sm:$0xff]
    %v27 = vld [vmem:[%s1 + $0x58] sm:$0xff]
    %v28 = vld [vmem:[%s1 + $0x60] sm:$0xff]
    %v29 = vld [vmem:[%s1 + $0x68] sm:$0xff]
    %v30 = vld [vmem:[%s1 + $0x70] sm:$0xff]
    %v31 = vld [vmem:[%s1 + $0x78] sm:$0xff]
    %v32 = vld [vmem:[%s2] sm:$0x1]
    %v34 = vperm.slane %v32, 0
    %vm36 = vcmask 130048
    %v38 = vsel %vm36, %v15, 0
    %v41 = vsel %vm36, %v16, 0
    %v44 = vsel %vm36, %v17, 0
    %v47 = vsel %vm36, %v18, 0
    %v50 = vsel %vm36, %v19, 0
    %v53 = vsel %vm36, %v20, 0
    %v56 = vsel %vm36, %v21, 0
    %v59 = vsel %vm36, %v22, 0
    %v62 = vsel %vm36, %v23, 0
    %v65 = vsel %vm36, %v24, 0
    %v68 = vsel %vm36, %v25, 0
    %v71 = vsel %vm36, %v26, 0
    %v74 = vsel %vm36, %v27, 0
    %v77 = vsel %vm36, %v28, 0
    %v80 = vsel %vm36, %v29, 0
    %v83 = vsel %vm36, %v30, 0
    %v86 = vsel %vm36, %v31, 0
    %88 = vmatpush.xpose.msra.mxu0 %v86
    %89 = vmatpush.xpose.msra.mxu0 %v83
    %90 = vmatpush.xpose.msra.mxu0 %v80
    %91 = vmatpush.xpose.msra.mxu0 %v77
    %92 = vmatpush.xpose.msra.mxu0 %v74
    %93 = vmatpush.xpose.msra.mxu0 %v71
    %94 = vmatpush.xpose.msra.mxu0 %v68
    %95 = vmatpush.xpose.msra.mxu0 %v65
    %96 = vmatpush.xpose.msra.mxu0 %v62
    %97 = vmatpush.xpose.msra.mxu0 %v59
    %98 = vmatpush.xpose.msra.mxu0 %v56
    %99 = vmatpush.xpose.msra.mxu0 %v53
    %100 = vmatpush.xpose.msra.mxu0 %v50
    %101 = vmatpush.xpose.msra.mxu0 %v47
    %102 = vmatpush.xpose.msra.mxu0 %v44
    %103 = vmatpush.xpose.msra.mxu0 %v41
    %104 = vmatmul.f32.gmra.mxu0 %v38
    %v105 = vpop.f32.mrf.mxu0
    %v106 = vadd.f32 %v34, %v105
    %107 = vdwg.mxu0
    %108 = vst [vmem:[#allocation2] sm:$0xf] %v106
    // Predicated region
    $region14: #{tpu_custom_call.1} parent=1 // pred_check
      _
    $region15: #{tpu_custom_call.1} parent=1 // pred_check_branch
      %110 = sbr.rel (0) target = $region17
    $region16: #{tpu_custom_call.1} parent=1 // pred_region
      %112 = vsyncadd [#allocation3], 0
      %s114 = sshll.u32 [#allocation2], 4
      %s115 = int_to_ptr.vmem [resolvable:$true] %s114
      %s116 = sshll.u32 %s3, 4
      %s117 = int_to_ptr.hbm [resolvable:$true] %s116
      %119 = dma.vmem_to_hbm [thread:$0]  %s115, 64, %s117, [#allocation3]
    $region17: #{tpu_custom_call.1} parent=1 // pred_fallthru
      _
    // Predicated region
    $region18: #{tpu_custom_call.1} parent=1 // pred_check
      _
    $region19: #{tpu_custom_call.1} parent=1 // pred_check_branch
      %121 = sbr.rel (0) target = $region21
    $region20: #{tpu_custom_call.1} parent=1 // pred_region
      %123 = dma.done [#allocation3], 64
    $region21: #{tpu_custom_call.1} parent=1 // pred_fallthru
      _
    %124 = vsyncpa [#allocation3], 1

</llo_original>
